<compile_context>
chip_gen: v7x
topology: tpu7x:2x2x1
jax: 0.10.0
libtpu: 0.0.40
codegen_flags: <defaults>
</compile_context>

<pallas_src>
import jax
import jax.numpy as jnp
from jax import lax
from jax.experimental import pallas as pl
from jax.experimental.pallas import tpu as pltpu

_BN_EPS = 1e-5
_LANE = 128
_SUBLANE = 8


def _round_up(x, m):
    return ((x + m - 1) // m) * m


def _make_fused_mlp_kernel(n_layers, n_real, n_pad):
    """Kernel over refs: (x, w_0, gb_0, ..., w_{L-1}, gb_{L-1}, out)."""
    inv_n = 1.0 / float(n_real)          # static; no runtime divide
    need_row_mask = (n_pad != n_real)

    def kernel(x_ref, *refs):
        o_ref = refs[-1]
        act = x_ref[...]                                   # (N_pad, Cin_pad) f32

        if need_row_mask:
            # (N_pad, 1) float mask of real batch rows (hoisted out of the loop).
            row_ids = lax.broadcasted_iota(jnp.int32, (n_pad, 1), 0)
            row_mask = (row_ids < n_real).astype(jnp.float32)

        for l in range(n_layers):                          # statically unrolled
            w = refs[2 * l][...]                           # (Cin_pad, Cout_pad)
            gb = refs[2 * l + 1][...]                      # (2, Cout_pad)
            gamma = gb[0:1, :]
            beta = gb[1:2, :]

            # Linear (bias omitted: exactly cancelled by BN mean subtraction).
            y = jnp.dot(act, w, preferred_element_type=jnp.float32)

            # Training-mode batch stats. Padded rows of `act` are zero, so the
            # full-tile sums equal the real-row sums; divide by the real N.
            sum_y = jnp.sum(y, axis=0, keepdims=True)          # (1, Cout_pad)
            sum_y2 = jnp.sum(y * y, axis=0, keepdims=True)
            mean = sum_y * inv_n
            var = jnp.maximum(sum_y2 * inv_n - mean * mean, 0.0)

            # Folded BN: one mul + one add + max per element in the epilogue.
            s = gamma * lax.rsqrt(var + _BN_EPS)               # EUP rsqrt
            t = beta - mean * s
            act = jnp.maximum(y * s + t, 0.0)

            if need_row_mask and l < n_layers - 1:
                # Keep padded batch rows exactly zero so they don't pollute the
                # next layer's batch statistics (last layer is sliced outside).
                act = act * row_mask

        o_ref[...] = act                                    # lane-dense store

    return kernel


def decoder_forward(x, packed_params, out_channel):
    """Fused decoder forward. x: (N, Cin) f32.

    packed_params: list of (w_t_padded (Cin_pad, Cout_pad), gb (2, Cout_pad)).
    Returns (N, out_channel) f32.
    """
    n, c_in = x.shape
    c_in_pad = packed_params[0][0].shape[0]
    n_pad = _round_up(n, _SUBLANE)
    pad_rows = n_pad - n
    pad_cols = c_in_pad - c_in
    if pad_rows or pad_cols:
        # Zero-pad batch (sublane-dense) and channel (lane-dense) axes.
        x = jnp.pad(x, ((0, pad_rows), (0, pad_cols)))

    c_out_pad = packed_params[-1][0].shape[1]
    n_layers = len(packed_params)

    in_specs = [pl.BlockSpec((n_pad, c_in_pad), lambda i: (0, 0))]
    operands = [x]
    for (w_t, gb) in packed_params:
        in_specs.append(pl.BlockSpec(w_t.shape, lambda i: (0, 0)))
        in_specs.append(pl.BlockSpec(gb.shape, lambda i: (0, 0)))
        operands.append(w_t)
        operands.append(gb)

    out_padded = pl.pallas_call(
        _make_fused_mlp_kernel(n_layers, n, n_pad),
        out_shape=jax.ShapeDtypeStruct((n_pad, c_out_pad), jnp.float32),
        grid=(1,),
        in_specs=in_specs,
        out_specs=pl.BlockSpec((n_pad, c_out_pad), lambda i: (0, 0)),
        compiler_params=pltpu.CompilerParams(
            dimension_semantics=("arbitrary",)),
    )(*operands)
    # Strip zero-padded batch rows and channels.
    return out_padded[:n, :out_channel]


def init_decoder_params(key, in_channel, mlp):
    """PyTorch-default-style params: nn.Linear uniform(+/- 1/sqrt(fan_in)),
    nn.BatchNorm1d gamma=1, beta=0. Kept in raw form for the reference."""
    params = []
    last = in_channel
    for out_c in mlp:
        key, kw, kb = jax.random.split(key, 3)
        bound = 1.0 / jnp.sqrt(jnp.float32(last))
        w = jax.random.uniform(kw, (out_c, last), jnp.float32, -bound, bound)
        b = jax.random.uniform(kb, (out_c,), jnp.float32, -bound, bound)
        gamma = jnp.ones((out_c,), jnp.float32)
        beta = jnp.zeros((out_c,), jnp.float32)
        params.append((w, b, gamma, beta))
        last = out_c
    return params


def pack_decoder_params(params, in_channel):
    """One-time layout prep (hoisted out of the hot path):
      * transpose Linear weights to (Cin, Cout),
      * zero-pad every channel dim up to a multiple of 128 (lane-dense),
      * pack gamma/beta into a single (2, Cout_pad) array,
      * drop the Linear bias (cancelled exactly by training-mode BN)."""
    packed = []
    last = in_channel
    last_pad = _round_up(in_channel, _LANE)
    for (w, _b, gamma, beta) in params:
        out_c = w.shape[0]
        out_pad = _round_up(out_c, _LANE)
        w_t = jnp.zeros((last_pad, out_pad), jnp.float32)
        w_t = w_t.at[:last, :out_c].set(jnp.transpose(w))
        gb = jnp.zeros((2, out_pad), jnp.float32)
        gb = gb.at[0, :out_c].set(gamma)
        gb = gb.at[1, :out_c].set(beta)
        packed.append((w_t, gb))
        last, last_pad = out_c, out_pad
    return packed


def decoder_forward_ref(x, params):
    """Pure-JAX reference mirroring the PyTorch module (bias included)."""
    for (w, b, gamma, beta) in params:
        y = x @ w.T + b
        mean = jnp.mean(y, axis=0, keepdims=True)
        var = jnp.mean((y - mean) ** 2, axis=0, keepdims=True)
        y_hat = (y - mean) / jnp.sqrt(var + _BN_EPS)
        x = jnp.maximum(y_hat * gamma + beta, 0.0)
    return x


if __name__ == "__main__":
    key = jax.random.PRNGKey(0)
    k_x, k_p = jax.random.split(key)

    # batch=6 deliberately NOT a multiple of 8: exercises the sublane-padding
    # + exact-batch-statistics path.
    batch = 6
    in_channel = 16
    mlp = [32, 64]

    x = jax.random.normal(k_x, (batch, in_channel), dtype=jnp.float32)
    params = init_decoder_params(k_p, in_channel, mlp)
    packed = pack_decoder_params(params, in_channel)

    out = decoder_forward(x, packed, mlp[-1])
    out = jax.block_until_ready(out)

    ref = decoder_forward_ref(x, params)
    assert out.shape == (batch, mlp[-1])
    assert jnp.allclose(out, ref, atol=1e-4, rtol=1e-4), "mismatch vs reference"

    print("KERNEL_OK")
</pallas_src>

<mosaic_0001>
module attributes {stable_mosaic.version = 11 : i64} {
  func.func @kernel(%arg0: i32, %arg1: memref<8x128xf32, #tpu.memory_space<vmem>>, %arg2: memref<128x128xf32, #tpu.memory_space<vmem>>, %arg3: memref<2x128xf32, #tpu.memory_space<vmem>>, %arg4: memref<128x128xf32, #tpu.memory_space<vmem>>, %arg5: memref<2x128xf32, #tpu.memory_space<vmem>>, %arg6: memref<8x128xf32, #tpu.memory_space<vmem>>) attributes {dimension_semantics = [#tpu.dimension_semantics<arbitrary>], iteration_bounds = array<i64: 1>, scalar_prefetch = 0 : i64, scratch_operands = 0 : i64, tpu.core_type = #tpu.core_type<tc>, window_params = [{pipeline_mode = #tpu.pipeline_mode<synchronous>, transform_indices = @transform_0, window_bounds = array<i64: 8, 128>}, {pipeline_mode = #tpu.pipeline_mode<synchronous>, transform_indices = @transform_1, window_bounds = array<i64: 128, 128>}, {pipeline_mode = #tpu.pipeline_mode<synchronous>, transform_indices = @transform_2, window_bounds = array<i64: 2, 128>}, {pipeline_mode = #tpu.pipeline_mode<synchronous>, transform_indices = @transform_3, window_bounds = array<i64: 128, 128>}, {pipeline_mode = #tpu.pipeline_mode<synchronous>, transform_indices = @transform_4, window_bounds = array<i64: 2, 128>}, {pipeline_mode = #tpu.pipeline_mode<synchronous>, transform_indices = @transform_5, window_bounds = array<i64: 8, 128>}]} {
    %c0 = arith.constant 0 : index
    %c0_0 = arith.constant 0 : index
    %0 = vector.load %arg1[%c0, %c0_0] : memref<8x128xf32, #tpu.memory_space<vmem>>, vector<8x128xf32>
    %1 = tpu.iota {dimensions = array<i32: 0>} : vector<8x1xi32>
    %c6_i32 = arith.constant 6 : i32
    %2 = vector.broadcast %c6_i32 : i32 to vector<8x1xi32>
    %3 = arith.cmpi slt, %1, %2 : vector<8x1xi32>
    %4 = arith.extui %3 : vector<8x1xi1> to vector<8x1xi32>
    %5 = arith.sitofp %4 : vector<8x1xi32> to vector<8x1xf32>
    %c0_1 = arith.constant 0 : index
    %c0_2 = arith.constant 0 : index
    %6 = vector.load %arg2[%c0_1, %c0_2] : memref<128x128xf32, #tpu.memory_space<vmem>>, vector<128x128xf32>
    %c0_3 = arith.constant 0 : index
    %c0_4 = arith.constant 0 : index
    %7 = vector.load %arg3[%c0_3, %c0_4] : memref<2x128xf32, #tpu.memory_space<vmem>>, vector<2x128xf32>
    %8 = vector.extract_strided_slice %7 {offsets = [0, 0], sizes = [1, 128], strides = [1, 1]} : vector<2x128xf32> to vector<1x128xf32>
    %9 = vector.extract_strided_slice %7 {offsets = [1, 0], sizes = [1, 128], strides = [1, 1]} : vector<2x128xf32> to vector<1x128xf32>
    %cst = arith.constant dense<0.000000e+00> : vector<8x128xf32>
    %10 = tpu.matmul %0, %6, %cst {dimension_numbers = #tpu.dot_dimension_numbers<[1], [0], [0], [1], [0, 0, 1, 1], [], []>} : vector<8x128xf32>, vector<128x128xf32>, vector<8x128xf32> -> vector<8x128xf32>
    %cst_5 = arith.constant dense<0.000000e+00> : vector<128xf32>
    %11 = vector.multi_reduction <add>, %10, %cst_5 [0] : vector<8x128xf32> to vector<128xf32>
    %12 = vector.shape_cast %11 : vector<128xf32> to vector<1x128xf32>
    %13 = arith.mulf %10, %10 : vector<8x128xf32>
    %cst_6 = arith.constant dense<0.000000e+00> : vector<128xf32>
    %14 = vector.multi_reduction <add>, %13, %cst_6 [0] : vector<8x128xf32> to vector<128xf32>
    %15 = vector.shape_cast %14 : vector<128xf32> to vector<1x128xf32>
    %cst_7 = arith.constant 0.166666672 : f32
    %16 = vector.broadcast %cst_7 : f32 to vector<1x128xf32>
    %17 = arith.mulf %12, %16 : vector<1x128xf32>
    %cst_8 = arith.constant 0.166666672 : f32
    %18 = vector.broadcast %cst_8 : f32 to vector<1x128xf32>
    %19 = arith.mulf %15, %18 : vector<1x128xf32>
    %20 = arith.mulf %17, %17 : vector<1x128xf32>
    %21 = arith.subf %19, %20 : vector<1x128xf32>
    %cst_9 = arith.constant 0.000000e+00 : f32
    %22 = vector.broadcast %cst_9 : f32 to vector<1x128xf32>
    %23 = arith.maximumf %21, %22 : vector<1x128xf32>
    %cst_10 = arith.constant 9.99999974E-6 : f32
    %24 = vector.broadcast %cst_10 : f32 to vector<1x128xf32>
    %25 = arith.addf %23, %24 : vector<1x128xf32>
    %26 = math.rsqrt %25 : vector<1x128xf32>
    %27 = arith.mulf %8, %26 : vector<1x128xf32>
    %28 = arith.mulf %17, %27 : vector<1x128xf32>
    %29 = arith.subf %9, %28 : vector<1x128xf32>
    %30 = vector.broadcast %27 : vector<1x128xf32> to vector<8x128xf32>
    %31 = arith.mulf %10, %30 : vector<8x128xf32>
    %32 = vector.broadcast %29 : vector<1x128xf32> to vector<8x128xf32>
    %33 = arith.addf %31, %32 : vector<8x128xf32>
    %cst_11 = arith.constant 0.000000e+00 : f32
    %34 = vector.broadcast %cst_11 : f32 to vector<8x128xf32>
    %35 = arith.maximumf %33, %34 : vector<8x128xf32>
    %36 = vector.broadcast %5 : vector<8x1xf32> to vector<8x128xf32>
    %37 = arith.mulf %35, %36 : vector<8x128xf32>
    %c0_12 = arith.constant 0 : index
    %c0_13 = arith.constant 0 : index
    %38 = vector.load %arg4[%c0_12, %c0_13] : memref<128x128xf32, #tpu.memory_space<vmem>>, vector<128x128xf32>
    %c0_14 = arith.constant 0 : index
    %c0_15 = arith.constant 0 : index
    %39 = vector.load %arg5[%c0_14, %c0_15] : memref<2x128xf32, #tpu.memory_space<vmem>>, vector<2x128xf32>
    %40 = vector.extract_strided_slice %39 {offsets = [0, 0], sizes = [1, 128], strides = [1, 1]} : vector<2x128xf32> to vector<1x128xf32>
    %41 = vector.extract_strided_slice %39 {offsets = [1, 0], sizes = [1, 128], strides = [1, 1]} : vector<2x128xf32> to vector<1x128xf32>
    %cst_16 = arith.constant dense<0.000000e+00> : vector<8x128xf32>
    %42 = tpu.matmul %37, %38, %cst_16 {dimension_numbers = #tpu.dot_dimension_numbers<[1], [0], [0], [1], [0, 0, 1, 1], [], []>} : vector<8x128xf32>, vector<128x128xf32>, vector<8x128xf32> -> vector<8x128xf32>
    %cst_17 = arith.constant dense<0.000000e+00> : vector<128xf32>
    %43 = vector.multi_reduction <add>, %42, %cst_17 [0] : vector<8x128xf32> to vector<128xf32>
    %44 = vector.shape_cast %43 : vector<128xf32> to vector<1x128xf32>
    %45 = arith.mulf %42, %42 : vector<8x128xf32>
    %cst_18 = arith.constant dense<0.000000e+00> : vector<128xf32>
    %46 = vector.multi_reduction <add>, %45, %cst_18 [0] : vector<8x128xf32> to vector<128xf32>
    %47 = vector.shape_cast %46 : vector<128xf32> to vector<1x128xf32>
    %cst_19 = arith.constant 0.166666672 : f32
    %48 = vector.broadcast %cst_19 : f32 to vector<1x128xf32>
    %49 = arith.mulf %44, %48 : vector<1x128xf32>
    %cst_20 = arith.constant 0.166666672 : f32
    %50 = vector.broadcast %cst_20 : f32 to vector<1x128xf32>
    %51 = arith.mulf %47, %50 : vector<1x128xf32>
    %52 = arith.mulf %49, %49 : vector<1x128xf32>
    %53 = arith.subf %51, %52 : vector<1x128xf32>
    %cst_21 = arith.constant 0.000000e+00 : f32
    %54 = vector.broadcast %cst_21 : f32 to vector<1x128xf32>
    %55 = arith.maximumf %53, %54 : vector<1x128xf32>
    %cst_22 = arith.constant 9.99999974E-6 : f32
    %56 = vector.broadcast %cst_22 : f32 to vector<1x128xf32>
    %57 = arith.addf %55, %56 : vector<1x128xf32>
    %58 = math.rsqrt %57 : vector<1x128xf32>
    %59 = arith.mulf %40, %58 : vector<1x128xf32>
    %60 = arith.mulf %49, %59 : vector<1x128xf32>
    %61 = arith.subf %41, %60 : vector<1x128xf32>
    %62 = vector.broadcast %59 : vector<1x128xf32> to vector<8x128xf32>
    %63 = arith.mulf %42, %62 : vector<8x128xf32>
    %64 = vector.broadcast %61 : vector<1x128xf32> to vector<8x128xf32>
    %65 = arith.addf %63, %64 : vector<8x128xf32>
    %cst_23 = arith.constant 0.000000e+00 : f32
    %66 = vector.broadcast %cst_23 : f32 to vector<8x128xf32>
    %67 = arith.maximumf %65, %66 : vector<8x128xf32>
    %c0_24 = arith.constant 0 : index
    %c0_25 = arith.constant 0 : index
    %68 = vector.load %arg6[%c0_24, %c0_25] : memref<8x128xf32, #tpu.memory_space<vmem>>, vector<8x128xf32>
    tpu.vector_store %arg6[%c0_24, %c0_25], %67 {strides = array<i32>} : memref<8x128xf32, #tpu.memory_space<vmem>>, vector<8x128xf32>,
    return
  }
  func.func @transform_0(%arg0: i32) -> (i32, i32) {
    %c0_i32 = arith.constant 0 : i32
    %c0_i32_0 = arith.constant 0 : i32
    %c0_i32_1 = arith.constant 0 : i32
    return %c0_i32, %c0_i32_0 : i32, i32
  }
  func.func @transform_1(%arg0: i32) -> (i32, i32) {
    %c0_i32 = arith.constant 0 : i32
    %c0_i32_0 = arith.constant 0 : i32
    %c0_i32_1 = arith.constant 0 : i32
    return %c0_i32, %c0_i32_0 : i32, i32
  }
  func.func @transform_2(%arg0: i32) -> (i32, i32) {
    %c0_i32 = arith.constant 0 : i32
    %c0_i32_0 = arith.constant 0 : i32
    %c0_i32_1 = arith.constant 0 : i32
    return %c0_i32, %c0_i32_0 : i32, i32
  }
  func.func @transform_3(%arg0: i32) -> (i32, i32) {
    %c0_i32 = arith.constant 0 : i32
    %c0_i32_0 = arith.constant 0 : i32
    %c0_i32_1 = arith.constant 0 : i32
    return %c0_i32, %c0_i32_0 : i32, i32
  }
  func.func @transform_4(%arg0: i32) -> (i32, i32) {
    %c0_i32 = arith.constant 0 : i32
    %c0_i32_0 = arith.constant 0 : i32
    %c0_i32_1 = arith.constant 0 : i32
    return %c0_i32, %c0_i32_0 : i32, i32
  }
  func.func @transform_5(%arg0: i32) -> (i32, i32) {
    %c0_i32 = arith.constant 0 : i32
    %c0_i32_0 = arith.constant 0 : i32
    %c0_i32_1 = arith.constant 0 : i32
    return %c0_i32, %c0_i32_0 : i32, i32
  }
}

</mosaic_0001>

<llo_original>
// kernel: tpu_custom_call.1
$region0: #{tpu_custom_call.1}
  #allocation0 [shape = 'u32[]', space=smem, size = 0x4, offset = 0x4, fixed_abs, tag = 'smem constant byte address 0x4 - core index']
  #allocation1 [shape = 'u32[144,128]{1,0:T(1,128)}', space=vmem, size = 0x12000, scoped, tag = 'internal scratch']
  %s0 = inlined_call_operand.hbm [shape: f32[8,128], index: 0, kind: input, shape index: {}]
  %s1 = inlined_call_operand.hbm [shape: f32[128,128], index: 1, kind: input, shape index: {}]
  %s2 = inlined_call_operand.vmem [shape: f32[2,128], index: 2, kind: input, shape index: {}]
  %s3 = inlined_call_operand.hbm [shape: f32[128,128], index: 3, kind: input, shape index: {}]
  %s4 = inlined_call_operand.vmem [shape: f32[2,128], index: 4, kind: input, shape index: {}]
  %s5 = inlined_call_operand.hbm [shape: f32[8,128], index: 5, kind: output, shape index: {}]
  %s6 = sld [smem:[#allocation0]]
  $region42: #{tpu_custom_call.1} parent=0
    _
  %s8 = ssub.s32 1, %s6
  %s9 = scalar_select 0, %s8, %s6
  $region1: #{tpu_custom_call.1} parent=0
    #allocation2 [shape = 'u8[4096]{0}', space=vmem, size = 0x1000, scoped, tag = 'input window, operand 0, single buffered']
    #allocation3 [shape = 's32[1]{0}', space=sflag, size = 0x4, scoped, tag = 'scoped memory for tpu_custom_call.1']
    #allocation4 [shape = 's32[1]{0}', space=sflag, size = 0x4, scoped, tag = 'scoped memory for tpu_custom_call.1']
    #allocation5 [shape = 'u8[65536]{0}', space=vmem, size = 0x10000, scoped, tag = 'input window, operand 1, single buffered']
    #allocation6 [shape = 's32[1]{0}', space=sflag, size = 0x4, scoped, tag = 'scoped memory for tpu_custom_call.1']
    #allocation7 [shape = 'u8[65536]{0}', space=vmem, size = 0x10000, scoped, tag = 'input window, operand 3, single buffered']
    #allocation8 [shape = 'u8[4096]{0}', space=vmem, size = 0x1000, scoped, tag = 'output window, operand 0, single buffered']
    %10 = vsyncpa [#allocation3], 0
    %11 = vsyncpa [#allocation6], 0
    %12 = vsyncpa [#allocation4], 0
    // Predicated region
    $region2: #{tpu_custom_call.1} parent=1 // pred_check
      _
    $region3: #{tpu_custom_call.1} parent=1 // pred_check_branch
      %14 = sbr.rel (0) target = $region5
    $region4: #{tpu_custom_call.1} parent=1 // pred_region
      %s16 = ssub.s32 128, 128
      %17 = vsyncadd [#allocation3], %s16
      %s19 = sshll.u32 [#allocation2], 4
      %s20 = int_to_ptr.vmem [resolvable:$true] %s19
      %22 = dma.hbm_to_vmem [thread:$0]  %s0, 128, %s20, [#allocation3]
    $region5: #{tpu_custom_call.1} parent=1 // pred_fallthru
      _
    // Predicated region
    $region6: #{tpu_custom_call.1} parent=1 // pred_check
      _
    $region7: #{tpu_custom_call.1} parent=1 // pred_check_branch
      %24 = sbr.rel (0) target = $region9
    $region8: #{tpu_custom_call.1} parent=1 // pred_region
      %s26 = ssub.s32 2048, 2048
      %27 = vsyncadd [#allocation6], %s26
      %s28 = sshll.u32 [#allocation5], 4
      %s29 = int_to_ptr.vmem [resolvable:$true] %s28
      %34 = dma.hbm_to_vmem [thread:$0]  %s1, 2048, %s29, [#allocation6], 128, 128, 8
    $region9: #{tpu_custom_call.1} parent=1 // pred_fallthru
      _
    // Predicated region
    $region10: #{tpu_custom_call.1} parent=1 // pred_check
      _
    $region11: #{tpu_custom_call.1} parent=1 // pred_check_branch
      %36 = sbr.rel (0) target = $region13
    $region12: #{tpu_custom_call.1} parent=1 // pred_region
      _
    $region13: #{tpu_custom_call.1} parent=1 // pred_fallthru
      _
    // Predicated region
    $region14: #{tpu_custom_call.1} parent=1 // pred_check
      _
    $region15: #{tpu_custom_call.1} parent=1 // pred_check_branch
      %38 = sbr.rel (0) target = $region17
    $region16: #{tpu_custom_call.1} parent=1 // pred_region
      %s40 = ssub.s32 2048, 2048
      %41 = vsyncadd [#allocation6], %s40
      %s42 = sshll.u32 [#allocation7], 4
      %s43 = int_to_ptr.vmem [resolvable:$true] %s42
      %48 = dma.hbm_to_vmem [thread:$0]  %s3, 2048, %s43, [#allocation6], 128, 128, 8
    $region17: #{tpu_custom_call.1} parent=1 // pred_fallthru
      _
    // Predicated region
    $region18: #{tpu_custom_call.1} parent=1 // pred_check
      _
    $region19: #{tpu_custom_call.1} parent=1 // pred_check_branch
      %50 = sbr.rel (0) target = $region21
    $region20: #{tpu_custom_call.1} parent=1 // pred_region
      _
    $region21: #{tpu_custom_call.1} parent=1 // pred_fallthru
      _
    // Predicated region
    $region22: #{tpu_custom_call.1} parent=1 // pred_check
      _
    $region23: #{tpu_custom_call.1} parent=1 // pred_check_branch
      %52 = sbr.rel (0) target = $region25
    $region24: #{tpu_custom_call.1} parent=1 // pred_region
      %53 = dma.done [#allocation3], 128
    $region25: #{tpu_custom_call.1} parent=1 // pred_fallthru
      _
    // Predicated region
    $region26: #{tpu_custom_call.1} parent=1 // pred_check
      _
    $region27: #{tpu_custom_call.1} parent=1 // pred_check_branch
      %55 = sbr.rel (0) target = $region29
    $region28: #{tpu_custom_call.1} parent=1 // pred_region
      %56 = dma.done [#allocation6], 2048
    $region29: #{tpu_custom_call.1} parent=1 // pred_fallthru
      _
    // Predicated region
    $region30: #{tpu_custom_call.1} parent=1 // pred_check
      _
    $region31: #{tpu_custom_call.1} parent=1 // pred_check_branch
      %58 = sbr.rel (0) target = $region33
    $region32: #{tpu_custom_call.1} parent=1 // pred_region
      %59 = dma.done [#allocation6], 2048
    $region33: #{tpu_custom_call.1} parent=1 // pred_fallthru
      _
    %v60 = vld [vmem:[#allocation2] sm:$0xff]
    %v61 = vlaneseq
    %v62 = vshrl.u32 %v61, 7
    %vm63 = vcmp.lt.s32.totalorder %v62, 6
    %v64 = vsel %vm63, 1, 0
    %v65 = vcvt.s32.f32 %v64
    %v66 = vld [vmem:[#allocation5] sm:$0xff]
    %v67 = vld [vmem:[#allocation5 + $0x8] sm:$0xff]
    %v68 = vld [vmem:[#allocation5 + $0x10] sm:$0xff]
    %v69 = vld [vmem:[#allocation5 + $0x18] sm:$0xff]
    %v70 = vld [vmem:[#allocation5 + $0x20] sm:$0xff]
    %v71 = vld [vmem:[#allocation5 + $0x28] sm:$0xff]
    %v72 = vld [vmem:[#allocation5 + $0x30] sm:$0xff]
    %v73 = vld [vmem:[#allocation5 + $0x38] sm:$0xff]
    %v74 = vld [vmem:[#allocation5 + $0x40] sm:$0xff]
    %v75 = vld [vmem:[#allocation5 + $0x48] sm:$0xff]
    %v76 = vld [vmem:[#allocation5 + $0x50] sm:$0xff]
    %v77 = vld [vmem:[#allocation5 + $0x58] sm:$0xff]
    %v78 = vld [vmem:[#allocation5 + $0x60] sm:$0xff]
    %v79 = vld [vmem:[#allocation5 + $0x68] sm:$0xff]
    %v80 = vld [vmem:[#allocation5 + $0x70] sm:$0xff]
    %v81 = vld [vmem:[#allocation5 + $0x78] sm:$0xff]
    %v82 = vld [vmem:[%s2] sm:$0x3]
    %83 = vmatprep.subr.mxu0 0.0
    %84 = vmatpush1.msra.mxu0 %v66
    %85 = vmatprep.subr.mxu0 0.0
    %86 = vmatpush1.msra.mxu0 %v67
    %87 = vmatprep.subr.mxu0 0.0
    %88 = vmatpush1.msra.mxu0 %v68
    %89 = vmatprep.subr.mxu0 0.0
    %90 = vmatpush1.msra.mxu0 %v69
    %91 = vmatprep.subr.mxu0 0.0
    %92 = vmatpush1.msra.mxu0 %v70
    %93 = vmatprep.subr.mxu0 0.0
    %94 = vmatpush1.msra.mxu0 %v71
    %95 = vmatprep.subr.mxu0 0.0
    %96 = vmatpush1.msra.mxu0 %v72
    %97 = vmatprep.subr.mxu0 0.0
    %98 = vmatpush1.msra.mxu0 %v73
    %99 = vmatprep.subr.mxu0 0.0
    %100 = vmatpush1.msra.mxu0 %v74
    %101 = vmatprep.subr.mxu0 0.0
    %102 = vmatpush1.msra.mxu0 %v75
    %103 = vmatprep.subr.mxu0 0.0
    %104 = vmatpush1.msra.mxu0 %v76
    %105 = vmatprep.subr.mxu0 0.0
    %106 = vmatpush1.msra.mxu0 %v77
    %107 = vmatprep.subr.mxu0 0.0
    %108 = vmatpush1.msra.mxu0 %v78
    %109 = vmatprep.subr.mxu0 0.0
    %110 = vmatpush1.msra.mxu0 %v79
    %111 = vmatprep.subr.mxu0 0.0
    %112 = vmatpush1.msra.mxu0 %v80
    %113 = vmatprep.subr.mxu0 0.0
    %114 = vmatpush1.msra.mxu0 %v81
    %115 = vmatprep.subr.mxu0 0.0
    %116 = vmatpush1.msra.mxu0 0.0
    %117 = vmatprep.subr.mxu0 0.0
    %118 = vmatpush1.msra.mxu0 0.0
    %119 = vmatprep.subr.mxu0 0.0
    %120 = vmatpush1.msra.mxu0 0.0
    %121 = vmatprep.subr.mxu0 0.0
    %122 = vmatpush1.msra.mxu0 0.0
    %123 = vmatprep.subr.mxu0 0.0
    %124 = vmatpush1.msra.mxu0 0.0
    %125 = vmatprep.subr.mxu0 0.0
    %126 = vmatpush1.msra.mxu0 0.0
    %127 = vmatprep.subr.mxu0 0.0
    %128 = vmatpush1.msra.mxu0 0.0
    %129 = vmatprep.subr.mxu0 0.0
    %130 = vmatpush1.msra.mxu0 0.0
    %131 = vmatprep.subr.mxu0 0.0
    %132 = vmatpush1.msra.mxu0 0.0
    %133 = vmatprep.subr.mxu0 0.0
    %134 = vmatpush1.msra.mxu0 0.0
    %135 = vmatprep.subr.mxu0 0.0
    %136 = vmatpush1.msra.mxu0 0.0
    %137 = vmatprep.subr.mxu0 0.0
    %138 = vmatpush1.msra.mxu0 0.0
    %139 = vmatprep.subr.mxu0 0.0
    %140 = vmatpush1.msra.mxu0 0.0
    %141 = vmatprep.subr.mxu0 0.0
    %142 = vmatpush1.msra.mxu0 0.0
    %143 = vmatprep.subr.mxu0 0.0
    %144 = vmatpush1.msra.mxu0 0.0
    %145 = vmatprep.subr.mxu0 0.0
    %146 = vmatpush1.msra.mxu0 0.0
    %147 = vmatprep.mubr.f32.mxu0 0.0
    %148 = vmatmul.mubr.f32.gmra.mrb[0].mxu0 %v60
    %v149 = vpop.f32.mrb[0].mxu0
    %v150 = vadd.f32 0.0, %v149
    %v151 = vpop.f32.mrb[0].mxu0
    %152 = vdwg.mxu0
    %v153 = vrot.slane %v150, 4
    %v154 = vadd.f32 %v150, %v153
    %v155 = vrot.slane %v154, 2
    %v156 = vadd.f32 %v154, %v155
    %v157 = vrot.slane %v156, 1
    %v158 = vadd.f32 %v156, %v157
    %v159 = vmul.f32 %v150, %v150
    %v160 = vrot.slane %v159, 4
    %v161 = vadd.f32 %v159, %v160
    %v162 = vrot.slane %v161, 2
    %v163 = vadd.f32 %v161, %v162
    %v164 = vrot.slane %v163, 1
    %v165 = vadd.f32 %v163, %v164
    %v166 = vmul.f32 %v158, 0.16666667
    %v167 = vmul.f32 %v165, 0.16666667
    %v168 = vmul.f32 %v166, %v166
    %v169 = vsub.f32 %v167, %v168
    %v170 = vmax.f32 %v169, 0.0
    %v171 = vadd.f32 %v170, 1e-05
    %v172 = vrsqrt.pop %v171
    %v173 = vmul.f32 %v82, %v172
    %v174 = vmul.f32 %v166, %v173
    %v176 = vrot.slane %v174, 7
    %v178 = vsub.f32 %v82, %v176
    %v179 = vlaneseq
    %v180 = vshrl.u32 %v179, 7
    %v181 = vsub.s32 0, %v180
    %v182 = vrot.slane %v173, %v181
    %v183 = vmul.f32 %v150, %v182
    %v184 = vlaneseq
    %v185 = vshrl.u32 %v184, 7
    %v186 = vsub.s32 1, %v185
    %v187 = vrot.slane %v178, %v186
    %v188 = vadd.f32 %v183, %v187
    %v189 = vmax.f32 %v188, 0.0
    %v190 = vmul.f32 %v189, %v65
    %v191 = vld [vmem:[#allocation7] sm:$0xff]
    %v192 = vld [vmem:[#allocation7 + $0x8] sm:$0xff]
    %v193 = vld [vmem:[#allocation7 + $0x10] sm:$0xff]
    %v194 = vld [vmem:[#allocation7 + $0x18] sm:$0xff]
    %v195 = vld [vmem:[#allocation7 + $0x20] sm:$0xff]
    %v196 = vld [vmem:[#allocation7 + $0x28] sm:$0xff]
    %v197 = vld [vmem:[#allocation7 + $0x30] sm:$0xff]
    %v198 = vld [vmem:[#allocation7 + $0x38] sm:$0xff]
    %v199 = vld [vmem:[#allocation7 + $0x40] sm:$0xff]
    %v200 = vld [vmem:[#allocation7 + $0x48] sm:$0xff]
    %v201 = vld [vmem:[#allocation7 + $0x50] sm:$0xff]
    %v202 = vld [vmem:[#allocation7 + $0x58] sm:$0xff]
    %v203 = vld [vmem:[#allocation7 + $0x60] sm:$0xff]
    %v204 = vld [vmem:[#allocation7 + $0x68] sm:$0xff]
    %v205 = vld [vmem:[#allocation7 + $0x70] sm:$0xff]
    %v206 = vld [vmem:[#allocation7 + $0x78] sm:$0xff]
    %v207 = vld [vmem:[%s4] sm:$0x3]
    %208 = vmatprep.subr.mxu0 0.0
    %209 = vmatpush1.msra.mxu0 %v191
    %210 = vmatprep.subr.mxu0 0.0
    %211 = vmatpush1.msra.mxu0 %v192
    %212 = vmatprep.subr.mxu0 0.0
    %213 = vmatpush1.msra.mxu0 %v193
    %214 = vmatprep.subr.mxu0 0.0
    %215 = vmatpush1.msra.mxu0 %v194
    %216 = vmatprep.subr.mxu0 0.0
    %217 = vmatpush1.msra.mxu0 %v195
    %218 = vmatprep.subr.mxu0 0.0
    %219 = vmatpush1.msra.mxu0 %v196
    %220 = vmatprep.subr.mxu0 0.0
    %221 = vmatpush1.msra.mxu0 %v197
    %222 = vmatprep.subr.mxu0 0.0
    %223 = vmatpush1.msra.mxu0 %v198
    %224 = vmatprep.subr.mxu0 0.0
    %225 = vmatpush1.msra.mxu0 %v199
    %226 = vmatprep.subr.mxu0 0.0
    %227 = vmatpush1.msra.mxu0 %v200
    %228 = vmatprep.subr.mxu0 0.0
    %229 = vmatpush1.msra.mxu0 %v201
    %230 = vmatprep.subr.mxu0 0.0
    %231 = vmatpush1.msra.mxu0 %v202
    %232 = vmatprep.subr.mxu0 0.0
    %233 = vmatpush1.msra.mxu0 %v203
    %234 = vmatprep.subr.mxu0 0.0
    %235 = vmatpush1.msra.mxu0 %v204
    %236 = vmatprep.subr.mxu0 0.0
    %237 = vmatpush1.msra.mxu0 %v205
    %238 = vmatprep.subr.mxu0 0.0
    %239 = vmatpush1.msra.mxu0 %v206
    %240 = vmatprep.subr.mxu0 0.0
    %241 = vmatpush1.msra.mxu0 0.0
    %242 = vmatprep.subr.mxu0 0.0
    %243 = vmatpush1.msra.mxu0 0.0
    %244 = vmatprep.subr.mxu0 0.0
    %245 = vmatpush1.msra.mxu0 0.0
    %246 = vmatprep.subr.mxu0 0.0
    %247 = vmatpush1.msra.mxu0 0.0
    %248 = vmatprep.subr.mxu0 0.0
    %249 = vmatpush1.msra.mxu0 0.0
    %250 = vmatprep.subr.mxu0 0.0
    %251 = vmatpush1.msra.mxu0 0.0
    %252 = vmatprep.subr.mxu0 0.0
    %253 = vmatpush1.msra.mxu0 0.0
    %254 = vmatprep.subr.mxu0 0.0
    %255 = vmatpush1.msra.mxu0 0.0
    %256 = vmatprep.subr.mxu0 0.0
    %257 = vmatpush1.msra.mxu0 0.0
    %258 = vmatprep.subr.mxu0 0.0
    %259 = vmatpush1.msra.mxu0 0.0
    %260 = vmatprep.subr.mxu0 0.0
    %261 = vmatpush1.msra.mxu0 0.0
    %262 = vmatprep.subr.mxu0 0.0
    %263 = vmatpush1.msra.mxu0 0.0
    %264 = vmatprep.subr.mxu0 0.0
    %265 = vmatpush1.msra.mxu0 0.0
    %266 = vmatprep.subr.mxu0 0.0
    %267 = vmatpush1.msra.mxu0 0.0
    %268 = vmatprep.subr.mxu0 0.0
    %269 = vmatpush1.msra.mxu0 0.0
    %270 = vmatprep.subr.mxu0 0.0
    %271 = vmatpush1.msra.mxu0 0.0
    %272 = vmatprep.mubr.f32.mxu0 0.0
    %273 = vmatmul.mubr.f32.gmra.mrb[0].mxu0 %v190
    %v274 = vpop.f32.mrb[0].mxu0
    %v275 = vadd.f32 0.0, %v274
    %v276 = vpop.f32.mrb[0].mxu0
    %277 = vdwg.mxu0
    %v278 = vrot.slane %v275, 4
    %v279 = vadd.f32 %v275, %v278
    %v280 = vrot.slane %v279, 2
    %v281 = vadd.f32 %v279, %v280
    %v282 = vrot.slane %v281, 1
    %v283 = vadd.f32 %v281, %v282
    %v284 = vmul.f32 %v275, %v275
    %v285 = vrot.slane %v284, 4
    %v286 = vadd.f32 %v284, %v285
    %v287 = vrot.slane %v286, 2
    %v288 = vadd.f32 %v286, %v287
    %v289 = vrot.slane %v288, 1
    %v290 = vadd.f32 %v288, %v289
    %v291 = vmul.f32 %v283, 0.16666667
    %v292 = vmul.f32 %v290, 0.16666667
    %v293 = vmul.f32 %v291, %v291
    %v294 = vsub.f32 %v292, %v293
    %v295 = vmax.f32 %v294, 0.0
    %v296 = vadd.f32 %v295, 1e-05
    %v297 = vrsqrt.pop %v296
    %v298 = vmul.f32 %v207, %v297
    %v299 = vmul.f32 %v291, %v298
    %v301 = vrot.slane %v299, 7
    %v303 = vsub.f32 %v207, %v301
    %v304 = vlaneseq
    %v305 = vshrl.u32 %v304, 7
    %v306 = vsub.s32 0, %v305
    %v307 = vrot.slane %v298, %v306
    %v308 = vmul.f32 %v275, %v307
    %v309 = vlaneseq
    %v310 = vshrl.u32 %v309, 7
    %v311 = vsub.s32 1, %v310
    %v312 = vrot.slane %v303, %v311
    %v313 = vadd.f32 %v308, %v312
    %v314 = vmax.f32 %v313, 0.0
    %315 = vst [vmem:[#allocation8] sm:$0xff] %v314
    // Predicated region
    $region34: #{tpu_custom_call.1} parent=1 // pred_check
      _
    $region35: #{tpu_custom_call.1} parent=1 // pred_check_branch
      %317 = sbr.rel (0) target = $region37
    $region36: #{tpu_custom_call.1} parent=1 // pred_region
      %s319 = ssub.s32 128, 128
      %320 = vsyncadd [#allocation4], %s319
      %s322 = sshll.u32 [#allocation8], 4
      %s323 = int_to_ptr.vmem [resolvable:$true] %s322
      %325 = dma.vmem_to_hbm [thread:$0]  %s323, 128, %s5, [#allocation4]
    $region37: #{tpu_custom_call.1} parent=1 // pred_fallthru
      _
    // Predicated region
    $region38: #{tpu_custom_call.1} parent=1 // pred_check
      _
    $region39: #{tpu_custom_call.1} parent=1 // pred_check_branch
      %327 = sbr.rel (0) target = $region41
    $region40: #{tpu_custom_call.1} parent=1 // pred_region
      %328 = dma.done [#allocation4], 128
    $region41: #{tpu_custom_call.1} parent=1 // pred_fallthru
      _
    %329 = vsyncpa [#allocation3], 1
    %330 = vsyncpa [#allocation6], 1
    %331 = vsyncpa [#allocation4], 1

</llo_original>
